<compile_context>
chip_gen: v7x
topology: tpu7x:2x2x1
jax: 0.10.0
libtpu: 0.0.40
codegen_flags: <defaults>
</compile_context>

<pallas_src>
import functools

import jax
import jax.numpy as jnp
from jax import lax
from jax.experimental import pallas as pl
from jax.experimental.pallas import tpu as pltpu


def _round_up(x, m):
    return ((x + m - 1) // m) * m


def _cdiv(a, b):
    return -(-a // b)


def _choose_batch_tile(B, row_cap=1024, min_tiles=4):
    """Batch tile: multiple of 8, <= row_cap rows.

    Prefers >= min_tiles grid steps (when B allows) so v7x's 2 TensorCores both
    get work under dimension_semantics=("parallel",); large tiles amortize the
    ~0.35us per-grid-step overhead on all generations.
    """
    n_tiles = max(_cdiv(B, row_cap), min(min_tiles, _cdiv(B, 8)))
    return _round_up(_cdiv(B, n_tiles), 8)


def _make_kernel(input_dim, z_dim, category, output_dim, slab_total):
    C = category
    ZC = z_dim * category
    O = output_dim
    used = 2 * O + 3 * ZC + 2 * C
    pad = slab_total - used

    def kernel(in_ref,                 # packed [X | gumbel | eps] batch tile
               w1_ref, b1_ref,
               wh_ref, bh_ref,         # fused heads: [mu | logvar | logits]
               wd1_ref, bd1_ref,
               wd2_ref, bd2_ref,       # columns reordered c-major / o-minor
               wd3_ref, bd3_ref,
               slab_ref):              # packed [out|lat|z|mu|lv|cat|mask|pad]
        f32 = jnp.float32
        xin = in_ref[...]
        x = xin[:, 0:input_dim]
        gumbel = xin[:, input_dim:input_dim + C]
        eps = xin[:, input_dim + C:input_dim + C + ZC]

        # --- encoder_fc1 + sigmoid (shared by category & gaussian paths) ---
        enc = jnp.dot(x.astype(w1_ref.dtype), w1_ref[...],
                      preferred_element_type=f32) + b1_ref[...]
        s = jax.nn.sigmoid(enc)
        # TODO(synk): on v5e profile the EUP slot (f32-only sigmoid/exp); if it
        # binds once DMA is fixed, shrink the transcendental footprint first.

        # --- fused encoder heads: one MXU pass -> [mu | logvar | logits] ---
        heads = jnp.dot(s.astype(wh_ref.dtype), wh_ref[...],
                        preferred_element_type=f32) + bh_ref[...]
        mu = heads[:, 0:ZC]
        lv = heads[:, ZC:2 * ZC]
        logits = heads[:, 2 * ZC:2 * ZC + C]

        # --- category path: softmax(exp(logits)); log/div on (TM,1) columns ---
        v = jnp.exp(logits)
        vm = v - jnp.max(v, axis=-1, keepdims=True)
        ev = jnp.exp(vm)
        ssum = jnp.sum(ev, axis=-1, keepdims=True)      # (TM, 1)
        cat = ev * (1.0 / ssum)                         # divide a column, not the tile
        log_cat = vm - jnp.log(ssum)                    # log a column, not the tile

        # gumbel-max -> hard one-hot (forward value of gumbel_softmax_reparm;
        # temperature independent since softmax is monotone per row).
        y = log_cat + gumbel
        col = lax.broadcasted_iota(jnp.int32, y.shape, 1)
        rowmax = jnp.max(y, axis=-1, keepdims=True)
        eligible = jnp.where(y >= rowmax, col, C)       # first-index tie break
        first = jnp.min(eligible, axis=-1, keepdims=True)
        mask = (col == first).astype(f32)               # (TM, C) hard one-hot

        # --- gaussian reparameterisation ---
        z = mu + jnp.exp(0.5 * lv) * eps

        # --- decoder ---
        h = jax.nn.sigmoid(jnp.dot(z.astype(wd1_ref.dtype), wd1_ref[...],
                                   preferred_element_type=f32) + bd1_ref[...])
        lf = jax.nn.sigmoid(jnp.dot(h.astype(wd2_ref.dtype), wd2_ref[...],
                                    preferred_element_type=f32) + bd2_ref[...])
        # lf columns are c-major/o-minor: lf[:, c*O + o] == latent_feature[:, o, c]
        # so the bmm-with-one-hot == masked segment-sum -> C cheap VPU FMAs.
        lat = lf[:, 0:O] * mask[:, 0:1]
        for c in range(1, C):
            lat = lat + lf[:, c * O:(c + 1) * O] * mask[:, c:c + 1]

        out = jnp.dot(lat.astype(wd3_ref.dtype), wd3_ref[...],
                      preferred_element_type=f32) + bd3_ref[...]

        # --- lane-dense packed output (multiple-of-128 lanes): one unmasked
        # full-width store and one writeback DMA per grid step ---
        pieces = [out, lat, z, mu, lv, cat, mask]
        if pad:
            pieces.append(jnp.zeros((out.shape[0], pad), f32))
        slab_ref[...] = jnp.concatenate(pieces, axis=-1).astype(slab_ref.dtype)

    return kernel


def init_params(key, input_dim, hidden_dim, z_dim, category, output_dim):
    """Deterministic PyTorch-Linear-style init; weights stored (in, out)."""
    def linear(key, fan_in, fan_out):
        kw, kb = jax.random.split(key)
        bound = 1.0 / jnp.sqrt(fan_in)
        w = jax.random.uniform(kw, (fan_in, fan_out), jnp.float32, -bound, bound)
        b = jax.random.uniform(kb, (1, fan_out), jnp.float32, -bound, bound)
        return w, b

    keys = jax.random.split(key, 7)
    p = {}
    p["w1"], p["b1"] = linear(keys[0], input_dim, hidden_dim)
    p["wc"], p["bc"] = linear(keys[1], hidden_dim, category)
    p["wmu"], p["bmu"] = linear(keys[2], hidden_dim, z_dim * category)
    p["wlv"], p["blv"] = linear(keys[3], hidden_dim, z_dim * category)
    p["wd1"], p["bd1"] = linear(keys[4], z_dim * category, hidden_dim * category)
    p["wd2"], p["bd2"] = linear(keys[5], hidden_dim * category, output_dim * category)
    p["wd3"], p["bd3"] = linear(keys[6], output_dim, output_dim)
    return p


@functools.partial(jax.jit, static_argnames=(
    "z_dim", "category", "output_dim", "use_bf16", "slab_dtype",
    "single_buffer_weights"))
def vae_gmm_forward(X, gumbel, eps, params, *, z_dim, category, output_dim,
                    use_bf16=False, slab_dtype=jnp.float32,
                    single_buffer_weights=False):
    B, input_dim = X.shape
    C, O, ZC = category, output_dim, z_dim * category

    # packed output slab layout: [out | lat | z | mu | lv | cat | mask | pad]
    off = {"out": 0, "lat": O, "z": 2 * O, "mu": 2 * O + ZC,
           "lv": 2 * O + 2 * ZC, "cat": 2 * O + 3 * ZC, "mask": 2 * O + 3 * ZC + C}
    used = off["mask"] + C
    total = _round_up(used, 128)               # lane-dense (multiple of 128) slab

    kernel = _make_kernel(input_dim, z_dim, category, output_dim, total)

    # --- batch tiling (>= 4 grid steps when B allows, tiles up to 1024 rows) ---
    TM = _choose_batch_tile(B)
    B_pad = _round_up(B, TM)

    # pack X | gumbel | eps into one input slab -> one read DMA per grid step
    xin = jnp.concatenate([X, gumbel, eps], axis=-1)
    in_width = input_dim + C + ZC
    if B_pad != B:
        xin = jnp.pad(xin, ((0, B_pad - B), (0, 0)))

    # fuse the three encoder heads; widest (ZC) segments at lane offsets 0 / ZC
    wh = jnp.concatenate([params["wmu"], params["wlv"], params["wc"]], axis=1)
    bh = jnp.concatenate([params["bmu"], params["blv"], params["bc"]], axis=1)

    # reorder decoder_fc2 columns to c-major/o-minor so the bmm-with-one-hot
    # becomes C slice-multiply-adds in the kernel (no segsum matmul)
    HC = params["wd2"].shape[0]
    wd2 = params["wd2"].reshape(HC, O, C).transpose(0, 2, 1).reshape(HC, C * O)
    bd2 = params["bd2"].reshape(1, O, C).transpose(0, 2, 1).reshape(1, C * O)

    w1, wd1, wd3 = params["w1"], params["wd1"], params["wd3"]
    if use_bf16:
        # v6e/v7x deploy option (native MXU rate, half the weight VMEM/DMA);
        # keep off when checking against the f32 reference.
        w1, wh, wd1, wd2, wd3 = (a.astype(jnp.bfloat16)
                                 for a in (w1, wh, wd1, wd2, wd3))

    weights = (w1, params["b1"], wh, bh, wd1, params["bd1"],
               wd2, bd2, wd3, params["bd3"])

    # --- specs: tiled batch slabs + VMEM-resident (constant index) weights ---
    tile_in = pl.BlockSpec((TM, in_width), lambda i: (i, 0))
    if single_buffer_weights:
        # v7x/production option: constant-index weights need only one buffer,
        # halving the resident-weight VMEM against v7x's 64 MiB.
        resident = lambda a: pl.BlockSpec(a.shape, lambda i: (0, 0),
                                          pipeline_mode=pl.Buffered(1))
    else:
        resident = lambda a: pl.BlockSpec(a.shape, lambda i: (0, 0))
    in_specs = [tile_in] + [resident(a) for a in weights]
    out_specs = pl.BlockSpec((TM, total), lambda i: (i, 0))

    # --- VMEM budget from actual buffer sizes, clamped to v7x's 64 MiB ---
    out_itemsize = jnp.dtype(slab_dtype).itemsize
    w_bufs = 1 if single_buffer_weights else 2
    budget = (TM * in_width * 4 * 2                          # dbl-buffered input slab
              + TM * total * out_itemsize * 2                # dbl-buffered output slab
              + w_bufs * sum(int(w.size) * w.dtype.itemsize for w in weights)
              + TM * 4096)                                   # intermediates headroom
    vmem_limit = int(min(64 << 20, max(32 << 20, 2 * budget)))

    slab = pl.pallas_call(
        kernel,
        grid=(B_pad // TM,),
        in_specs=in_specs,
        out_specs=out_specs,
        out_shape=jax.ShapeDtypeStruct((B_pad, total), slab_dtype),
        compiler_params=pltpu.CompilerParams(
            dimension_semantics=("parallel",),
            vmem_limit_bytes=vmem_limit),
    )(xin, *weights)

    slab = slab[:B]
    out = slab[:, off["out"]:off["out"] + O]
    lat = slab[:, off["lat"]:off["lat"] + O]
    z = slab[:, off["z"]:off["z"] + ZC]
    mu = slab[:, off["mu"]:off["mu"] + ZC].reshape(B, z_dim, C)
    lv = slab[:, off["lv"]:off["lv"] + ZC].reshape(B, z_dim, C)
    cat = slab[:, off["cat"]:off["cat"] + C]
    mask_matrix = slab[:, off["mask"]:off["mask"] + C][:, :, None]
    return out, lat, z, cat, mu, lv, mask_matrix


def _reference(X, gumbel, eps, params, z_dim, category, output_dim):
    # Pure-JAX reference of the PyTorch forward; full-precision matmuls so the
    # comparison against the kernel's f32 MXU path is meaningful.
    with jax.default_matmul_precision("highest"):
        B = X.shape[0]
        enc = X @ params["w1"] + params["b1"]
        s = jax.nn.sigmoid(enc)
        logits = s @ params["wc"] + params["bc"]
        cat = jax.nn.softmax(jnp.exp(logits), axis=-1)
        y = jnp.log(cat) + gumbel
        mask = jax.nn.one_hot(jnp.argmax(y, axis=-1), category, dtype=jnp.float32)
        mu = s @ params["wmu"] + params["bmu"]
        lv = s @ params["wlv"] + params["blv"]
        z = mu + jnp.exp(0.5 * lv) * eps
        h = jax.nn.sigmoid(z @ params["wd1"] + params["bd1"])
        lf = jax.nn.sigmoid(h @ params["wd2"] + params["bd2"]).reshape(
            B, output_dim, category)
        lat = jnp.sum(lf * mask[:, None, :], axis=-1)
        out = lat @ params["wd3"] + params["bd3"]
        return (out, lat, z, cat,
                mu.reshape(B, z_dim, category), lv.reshape(B, z_dim, category),
                mask[:, :, None])


if __name__ == "__main__":
    # small shapes consistent with the module's forward; B=50 exercises both
    # batch padding and a multi-step ("parallel") grid.
    B, input_dim, hidden_dim, z_dim, category, output_dim = 50, 16, 32, 8, 4, 16
    temperature = 0.5  # forward value is independent of temperature (see note)

    key = jax.random.PRNGKey(0)
    kx, kp, kg, ke = jax.random.split(key, 4)
    X = jax.random.normal(kx, (B, input_dim), jnp.float32)
    params = init_params(kp, input_dim, hidden_dim, z_dim, category, output_dim)

    # gumbel noise and gaussian eps, drawn once and shared with the reference
    U = jax.random.uniform(kg, (B, category), jnp.float32)
    gumbel = -jnp.log(-jnp.log(U + 1e-20) + 1e-20)
    eps = jax.random.normal(ke, (B, z_dim * category), jnp.float32)

    outs = vae_gmm_forward(
        X, gumbel, eps, params,
        z_dim=z_dim, category=category, output_dim=output_dim)
    outs = jax.block_until_ready(outs)

    refs = _reference(X, gumbel, eps, params, z_dim, category, output_dim)
    for got, want in zip(outs, refs):
        assert got.shape == want.shape, (got.shape, want.shape)
        assert jnp.allclose(got, want, atol=1e-4, rtol=1e-4)

    print("KERNEL_OK")
</pallas_src>

<mosaic_0001>
module attributes {stable_mosaic.version = 11 : i64} {
  func.func @kernel(%arg0: i32, %arg1: memref<16x52xf32, #tpu.memory_space<vmem>>, %arg2: memref<16x32xf32, #tpu.memory_space<vmem>>, %arg3: memref<1x32xf32, #tpu.memory_space<vmem>>, %arg4: memref<32x68xf32, #tpu.memory_space<vmem>>, %arg5: memref<1x68xf32, #tpu.memory_space<vmem>>, %arg6: memref<32x128xf32, #tpu.memory_space<vmem>>, %arg7: memref<1x128xf32, #tpu.memory_space<vmem>>, %arg8: memref<128x64xf32, #tpu.memory_space<vmem>>, %arg9: memref<1x64xf32, #tpu.memory_space<vmem>>, %arg10: memref<16x16xf32, #tpu.memory_space<vmem>>, %arg11: memref<1x16xf32, #tpu.memory_space<vmem>>, %arg12: memref<16x256xf32, #tpu.memory_space<vmem>>) attributes {dimension_semantics = [#tpu.dimension_semantics<parallel>], iteration_bounds = array<i64: 4>, scalar_prefetch = 0 : i64, scratch_operands = 0 : i64, tpu.core_type = #tpu.core_type<tc>, window_params = [{transform_indices = @transform_0, window_bounds = array<i64: 16, 52>}, {pipeline_mode = #tpu.pipeline_mode<synchronous>, transform_indices = @transform_1, window_bounds = array<i64: 16, 32>}, {pipeline_mode = #tpu.pipeline_mode<synchronous>, transform_indices = @transform_2, window_bounds = array<i64: 1, 32>}, {pipeline_mode = #tpu.pipeline_mode<synchronous>, transform_indices = @transform_3, window_bounds = array<i64: 32, 68>}, {pipeline_mode = #tpu.pipeline_mode<synchronous>, transform_indices = @transform_4, window_bounds = array<i64: 1, 68>}, {pipeline_mode = #tpu.pipeline_mode<synchronous>, transform_indices = @transform_5, window_bounds = array<i64: 32, 128>}, {pipeline_mode = #tpu.pipeline_mode<synchronous>, transform_indices = @transform_6, window_bounds = array<i64: 1, 128>}, {pipeline_mode = #tpu.pipeline_mode<synchronous>, transform_indices = @transform_7, window_bounds = array<i64: 128, 64>}, {pipeline_mode = #tpu.pipeline_mode<synchronous>, transform_indices = @transform_8, window_bounds = array<i64: 1, 64>}, {pipeline_mode = #tpu.pipeline_mode<synchronous>, transform_indices = @transform_9, window_bounds = array<i64: 16, 16>}, {pipeline_mode = #tpu.pipeline_mode<synchronous>, transform_indices = @transform_10, window_bounds = array<i64: 1, 16>}, {transform_indices = @transform_11, window_bounds = array<i64: 16, 256>}]} {
    %c0 = arith.constant 0 : index
    %c0_0 = arith.constant 0 : index
    %0 = vector.load %arg1[%c0, %c0_0] : memref<16x52xf32, #tpu.memory_space<vmem>>, vector<16x52xf32>
    %1 = vector.extract_strided_slice %0 {offsets = [0, 0], sizes = [16, 16], strides = [1, 1]} : vector<16x52xf32> to vector<16x16xf32>
    %2 = vector.extract_strided_slice %0 {offsets = [0, 16], sizes = [16, 4], strides = [1, 1]} : vector<16x52xf32> to vector<16x4xf32>
    %3 = vector.extract_strided_slice %0 {offsets = [0, 20], sizes = [16, 32], strides = [1, 1]} : vector<16x52xf32> to vector<16x32xf32>
    %c0_1 = arith.constant 0 : index
    %c0_2 = arith.constant 0 : index
    %4 = vector.load %arg2[%c0_1, %c0_2] : memref<16x32xf32, #tpu.memory_space<vmem>>, vector<16x32xf32>
    %cst = arith.constant dense<0.000000e+00> : vector<16x32xf32>
    %5 = tpu.matmul %1, %4, %cst {dimension_numbers = #tpu.dot_dimension_numbers<[1], [0], [0], [1], [0, 0, 1, 1], [], []>} : vector<16x16xf32>, vector<16x32xf32>, vector<16x32xf32> -> vector<16x32xf32>
    %c0_3 = arith.constant 0 : index
    %c0_4 = arith.constant 0 : index
    %6 = vector.load %arg3[%c0_3, %c0_4] : memref<1x32xf32, #tpu.memory_space<vmem>>, vector<1x32xf32>
    %7 = vector.broadcast %6 : vector<1x32xf32> to vector<16x32xf32>
    %8 = arith.addf %5, %7 : vector<16x32xf32>
    %9 = arith.negf %8 : vector<16x32xf32>
    %10 = math.exp %9 : vector<16x32xf32>
    %cst_5 = arith.constant 1.000000e+00 : f32
    %11 = vector.broadcast %cst_5 : f32 to vector<16x32xf32>
    %12 = arith.addf %11, %10 : vector<16x32xf32>
    %13 = arith.divf %11, %12 : vector<16x32xf32>
    %c0_6 = arith.constant 0 : index
    %c0_7 = arith.constant 0 : index
    %14 = vector.load %arg4[%c0_6, %c0_7] : memref<32x68xf32, #tpu.memory_space<vmem>>, vector<32x68xf32>
    %cst_8 = arith.constant dense<0.000000e+00> : vector<16x68xf32>
    %15 = tpu.matmul %13, %14, %cst_8 {dimension_numbers = #tpu.dot_dimension_numbers<[1], [0], [0], [1], [0, 0, 1, 1], [], []>} : vector<16x32xf32>, vector<32x68xf32>, vector<16x68xf32> -> vector<16x68xf32>
    %c0_9 = arith.constant 0 : index
    %c0_10 = arith.constant 0 : index
    %16 = vector.load %arg5[%c0_9, %c0_10] : memref<1x68xf32, #tpu.memory_space<vmem>>, vector<1x68xf32>
    %17 = vector.broadcast %16 : vector<1x68xf32> to vector<16x68xf32>
    %18 = arith.addf %15, %17 : vector<16x68xf32>
    %19 = vector.extract_strided_slice %18 {offsets = [0, 0], sizes = [16, 32], strides = [1, 1]} : vector<16x68xf32> to vector<16x32xf32>
    %20 = vector.extract_strided_slice %18 {offsets = [0, 32], sizes = [16, 32], strides = [1, 1]} : vector<16x68xf32> to vector<16x32xf32>
    %21 = vector.extract_strided_slice %18 {offsets = [0, 64], sizes = [16, 4], strides = [1, 1]} : vector<16x68xf32> to vector<16x4xf32>
    %22 = math.exp %21 : vector<16x4xf32>
    %cst_11 = arith.constant dense<0xFF800000> : vector<16xf32>
    %23 = vector.multi_reduction <maximumf>, %22, %cst_11 [1] : vector<16x4xf32> to vector<16xf32>
    %24 = vector.shape_cast %23 : vector<16xf32> to vector<16x1xf32>
    %25 = vector.broadcast %24 : vector<16x1xf32> to vector<16x4xf32>
    %26 = arith.subf %22, %25 : vector<16x4xf32>
    %27 = math.exp %26 : vector<16x4xf32>
    %cst_12 = arith.constant dense<0.000000e+00> : vector<16xf32>
    %28 = vector.multi_reduction <add>, %27, %cst_12 [1] : vector<16x4xf32> to vector<16xf32>
    %29 = vector.shape_cast %28 : vector<16xf32> to vector<16x1xf32>
    %cst_13 = arith.constant 1.000000e+00 : f32
    %30 = vector.broadcast %cst_13 : f32 to vector<16x1xf32>
    %31 = arith.divf %30, %29 : vector<16x1xf32>
    %32 = vector.broadcast %31 : vector<16x1xf32> to vector<16x4xf32>
    %33 = arith.mulf %27, %32 : vector<16x4xf32>
    %34 = math.log %29 : vector<16x1xf32>
    %35 = vector.broadcast %34 : vector<16x1xf32> to vector<16x4xf32>
    %36 = arith.subf %26, %35 : vector<16x4xf32>
    %37 = arith.addf %36, %2 : vector<16x4xf32>
    %38 = tpu.iota {dimensions = array<i32: 1>} : vector<16x4xi32>
    %cst_14 = arith.constant dense<0xFF800000> : vector<16xf32>
    %39 = vector.multi_reduction <maximumf>, %37, %cst_14 [1] : vector<16x4xf32> to vector<16xf32>
    %40 = vector.shape_cast %39 : vector<16xf32> to vector<16x1xf32>
    %41 = vector.broadcast %40 : vector<16x1xf32> to vector<16x4xf32>
    %42 = arith.cmpf oge, %37, %41 : vector<16x4xf32>
    %c4_i32 = arith.constant 4 : i32
    %43 = vector.broadcast %c4_i32 : i32 to vector<16x4xi32>
    %44 = arith.select %42, %38, %43 : vector<16x4xi1>, vector<16x4xi32>
    %cst_15 = arith.constant dense<2147483647> : vector<16xi32>
    %45 = vector.multi_reduction <minsi>, %44, %cst_15 [1] : vector<16x4xi32> to vector<16xi32>
    %46 = vector.shape_cast %45 : vector<16xi32> to vector<16x1xi32>
    %47 = vector.broadcast %46 : vector<16x1xi32> to vector<16x4xi32>
    %48 = arith.cmpi eq, %38, %47 : vector<16x4xi32>
    %49 = arith.extui %48 : vector<16x4xi1> to vector<16x4xi32>
    %50 = arith.sitofp %49 : vector<16x4xi32> to vector<16x4xf32>
    %cst_16 = arith.constant 5.000000e-01 : f32
    %51 = vector.broadcast %cst_16 : f32 to vector<16x32xf32>
    %52 = arith.mulf %51, %20 : vector<16x32xf32>
    %53 = math.exp %52 : vector<16x32xf32>
    %54 = arith.mulf %53, %3 : vector<16x32xf32>
    %55 = arith.addf %19, %54 : vector<16x32xf32>
    %c0_17 = arith.constant 0 : index
    %c0_18 = arith.constant 0 : index
    %56 = vector.load %arg6[%c0_17, %c0_18] : memref<32x128xf32, #tpu.memory_space<vmem>>, vector<32x128xf32>
    %cst_19 = arith.constant dense<0.000000e+00> : vector<16x128xf32>
    %57 = tpu.matmul %55, %56, %cst_19 {dimension_numbers = #tpu.dot_dimension_numbers<[1], [0], [0], [1], [0, 0, 1, 1], [], []>} : vector<16x32xf32>, vector<32x128xf32>, vector<16x128xf32> -> vector<16x128xf32>
    %c0_20 = arith.constant 0 : index
    %c0_21 = arith.constant 0 : index
    %58 = vector.load %arg7[%c0_20, %c0_21] : memref<1x128xf32, #tpu.memory_space<vmem>>, vector<1x128xf32>
    %59 = vector.broadcast %58 : vector<1x128xf32> to vector<16x128xf32>
    %60 = arith.addf %57, %59 : vector<16x128xf32>
    %61 = arith.negf %60 : vector<16x128xf32>
    %62 = math.exp %61 : vector<16x128xf32>
    %cst_22 = arith.constant 1.000000e+00 : f32
    %63 = vector.broadcast %cst_22 : f32 to vector<16x128xf32>
    %64 = arith.addf %63, %62 : vector<16x128xf32>
    %65 = arith.divf %63, %64 : vector<16x128xf32>
    %c0_23 = arith.constant 0 : index
    %c0_24 = arith.constant 0 : index
    %66 = vector.load %arg8[%c0_23, %c0_24] : memref<128x64xf32, #tpu.memory_space<vmem>>, vector<128x64xf32>
    %cst_25 = arith.constant dense<0.000000e+00> : vector<16x64xf32>
    %67 = tpu.matmul %65, %66, %cst_25 {dimension_numbers = #tpu.dot_dimension_numbers<[1], [0], [0], [1], [0, 0, 1, 1], [], []>} : vector<16x128xf32>, vector<128x64xf32>, vector<16x64xf32> -> vector<16x64xf32>
    %c0_26 = arith.constant 0 : index
    %c0_27 = arith.constant 0 : index
    %68 = vector.load %arg9[%c0_26, %c0_27] : memref<1x64xf32, #tpu.memory_space<vmem>>, vector<1x64xf32>
    %69 = vector.broadcast %68 : vector<1x64xf32> to vector<16x64xf32>
    %70 = arith.addf %67, %69 : vector<16x64xf32>
    %71 = arith.negf %70 : vector<16x64xf32>
    %72 = math.exp %71 : vector<16x64xf32>
    %cst_28 = arith.constant 1.000000e+00 : f32
    %73 = vector.broadcast %cst_28 : f32 to vector<16x64xf32>
    %74 = arith.addf %73, %72 : vector<16x64xf32>
    %75 = arith.divf %73, %74 : vector<16x64xf32>
    %76 = vector.extract_strided_slice %75 {offsets = [0, 0], sizes = [16, 16], strides = [1, 1]} : vector<16x64xf32> to vector<16x16xf32>
    %77 = vector.extract_strided_slice %50 {offsets = [0, 0], sizes = [16, 1], strides = [1, 1]} : vector<16x4xf32> to vector<16x1xf32>
    %78 = vector.broadcast %77 : vector<16x1xf32> to vector<16x16xf32>
    %79 = arith.mulf %76, %78 : vector<16x16xf32>
    %80 = vector.extract_strided_slice %75 {offsets = [0, 16], sizes = [16, 16], strides = [1, 1]} : vector<16x64xf32> to vector<16x16xf32>
    %81 = vector.extract_strided_slice %50 {offsets = [0, 1], sizes = [16, 1], strides = [1, 1]} : vector<16x4xf32> to vector<16x1xf32>
    %82 = vector.broadcast %81 : vector<16x1xf32> to vector<16x16xf32>
    %83 = arith.mulf %80, %82 : vector<16x16xf32>
    %84 = arith.addf %79, %83 : vector<16x16xf32>
    %85 = vector.extract_strided_slice %75 {offsets = [0, 32], sizes = [16, 16], strides = [1, 1]} : vector<16x64xf32> to vector<16x16xf32>
    %86 = vector.extract_strided_slice %50 {offsets = [0, 2], sizes = [16, 1], strides = [1, 1]} : vector<16x4xf32> to vector<16x1xf32>
    %87 = vector.broadcast %86 : vector<16x1xf32> to vector<16x16xf32>
    %88 = arith.mulf %85, %87 : vector<16x16xf32>
    %89 = arith.addf %84, %88 : vector<16x16xf32>
    %90 = vector.extract_strided_slice %75 {offsets = [0, 48], sizes = [16, 16], strides = [1, 1]} : vector<16x64xf32> to vector<16x16xf32>
    %91 = vector.extract_strided_slice %50 {offsets = [0, 3], sizes = [16, 1], strides = [1, 1]} : vector<16x4xf32> to vector<16x1xf32>
    %92 = vector.broadcast %91 : vector<16x1xf32> to vector<16x16xf32>
    %93 = arith.mulf %90, %92 : vector<16x16xf32>
    %94 = arith.addf %89, %93 : vector<16x16xf32>
    %c0_29 = arith.constant 0 : index
    %c0_30 = arith.constant 0 : index
    %95 = vector.load %arg10[%c0_29, %c0_30] : memref<16x16xf32, #tpu.memory_space<vmem>>, vector<16x16xf32>
    %cst_31 = arith.constant dense<0.000000e+00> : vector<16x16xf32>
    %96 = tpu.matmul %94, %95, %cst_31 {dimension_numbers = #tpu.dot_dimension_numbers<[1], [0], [0], [1], [0, 0, 1, 1], [], []>} : vector<16x16xf32>, vector<16x16xf32>, vector<16x16xf32> -> vector<16x16xf32>
    %c0_32 = arith.constant 0 : index
    %c0_33 = arith.constant 0 : index
    %97 = vector.load %arg11[%c0_32, %c0_33] : memref<1x16xf32, #tpu.memory_space<vmem>>, vector<1x16xf32>
    %98 = vector.broadcast %97 : vector<1x16xf32> to vector<16x16xf32>
    %99 = arith.addf %96, %98 : vector<16x16xf32>
    %cst_34 = arith.constant 0.000000e+00 : f32
    %100 = vector.broadcast %cst_34 : f32 to vector<16x120xf32>
    %101 = tpu.concatenate %99, %94, %55, %19, %20, %33, %50, %100 in 1 : vector<16x16xf32>, vector<16x16xf32>, vector<16x32xf32>, vector<16x32xf32>, vector<16x32xf32>, vector<16x4xf32>, vector<16x4xf32>, vector<16x120xf32> -> vector<16x256xf32>
    %c0_35 = arith.constant 0 : index
    %c0_36 = arith.constant 0 : index
    %102 = vector.load %arg12[%c0_35, %c0_36] : memref<16x256xf32, #tpu.memory_space<vmem>>, vector<16x256xf32>
    tpu.vector_store %arg12[%c0_35, %c0_36], %101 {strides = array<i32>} : memref<16x256xf32, #tpu.memory_space<vmem>>, vector<16x256xf32>,
    return
  }
  func.func @transform_0(%arg0: i32) -> (i32, i32) {
    %c0_i32 = arith.constant 0 : i32
    %c0_i32_0 = arith.constant 0 : i32
    return %arg0, %c0_i32 : i32, i32
  }
  func.func @transform_1(%arg0: i32) -> (i32, i32) {
    %c0_i32 = arith.constant 0 : i32
    %c0_i32_0 = arith.constant 0 : i32
    %c0_i32_1 = arith.constant 0 : i32
    return %c0_i32, %c0_i32_0 : i32, i32
  }
  func.func @transform_2(%arg0: i32) -> (i32, i32) {
    %c0_i32 = arith.constant 0 : i32
    %c0_i32_0 = arith.constant 0 : i32
    %c0_i32_1 = arith.constant 0 : i32
    return %c0_i32, %c0_i32_0 : i32, i32
  }
  func.func @transform_3(%arg0: i32) -> (i32, i32) {
    %c0_i32 = arith.constant 0 : i32
    %c0_i32_0 = arith.constant 0 : i32
    %c0_i32_1 = arith.constant 0 : i32
    return %c0_i32, %c0_i32_0 : i32, i32
  }
  func.func @transform_4(%arg0: i32) -> (i32, i32) {
    %c0_i32 = arith.constant 0 : i32
    %c0_i32_0 = arith.constant 0 : i32
    %c0_i32_1 = arith.constant 0 : i32
    return %c0_i32, %c0_i32_0 : i32, i32
  }
  func.func @transform_5(%arg0: i32) -> (i32, i32) {
    %c0_i32 = arith.constant 0 : i32
    %c0_i32_0 = arith.constant 0 : i32
    %c0_i32_1 = arith.constant 0 : i32
    return %c0_i32, %c0_i32_0 : i32, i32
  }
  func.func @transform_6(%arg0: i32) -> (i32, i32) {
    %c0_i32 = arith.constant 0 : i32
    %c0_i32_0 = arith.constant 0 : i32
    %c0_i32_1 = arith.constant 0 : i32
    return %c0_i32, %c0_i32_0 : i32, i32
  }
  func.func @transform_7(%arg0: i32) -> (i32, i32) {
    %c0_i32 = arith.constant 0 : i32
    %c0_i32_0 = arith.constant 0 : i32
    %c0_i32_1 = arith.constant 0 : i32
    return %c0_i32, %c0_i32_0 : i32, i32
  }
  func.func @transform_8(%arg0: i32) -> (i32, i32) {
    %c0_i32 = arith.constant 0 : i32
    %c0_i32_0 = arith.constant 0 : i32
    %c0_i32_1 = arith.constant 0 : i32
    return %c0_i32, %c0_i32_0 : i32, i32
  }
  func.func @transform_9(%arg0: i32) -> (i32, i32) {
    %c0_i32 = arith.constant 0 : i32
    %c0_i32_0 = arith.constant 0 : i32
    %c0_i32_1 = arith.constant 0 : i32
    return %c0_i32, %c0_i32_0 : i32, i32
  }
  func.func @transform_10(%arg0: i32) -> (i32, i32) {
    %c0_i32 = arith.constant 0 : i32
    %c0_i32_0 = arith.constant 0 : i32
    %c0_i32_1 = arith.constant 0 : i32
    return %c0_i32, %c0_i32_0 : i32, i32
  }
  func.func @transform_11(%arg0: i32) -> (i32, i32) {
    %c0_i32 = arith.constant 0 : i32
    %c0_i32_0 = arith.constant 0 : i32
    return %arg0, %c0_i32 : i32, i32
  }
}

</mosaic_0001>

<llo_original>
// kernel: vae_gmm_forward.1
$region0: #{vae_gmm_forward.1}
  #allocation0 [shape = 'u32[]', space=smem, size = 0x4, offset = 0x4, fixed_abs, tag = 'smem constant byte address 0x4 - core index']
  #allocation1 [shape = 'u32[144,128]{1,0:T(1,128)}', space=vmem, size = 0x12000, scoped, tag = 'internal scratch']
  %s0 = inlined_call_operand.vmem [shape: f32[64,52], index: 0, kind: input, shape index: {}]
  %s1 = inlined_call_operand.vmem [shape: f32[16,32], index: 1, kind: input, shape index: {}]
  %s2 = inlined_call_operand.vmem [shape: f32[1,32], index: 2, kind: input, shape index: {}]
  %s3 = inlined_call_operand.vmem [shape: f32[32,68], index: 3, kind: input, shape index: {}]
  %s4 = inlined_call_operand.vmem [shape: f32[1,68], index: 4, kind: input, shape index: {}]
  %s5 = inlined_call_operand.vmem [shape: f32[32,128], index: 5, kind: input, shape index: {}]
  %s6 = inlined_call_operand.vmem [shape: f32[1,128], index: 6, kind: input, shape index: {}]
  %s7 = inlined_call_operand.vmem [shape: f32[128,64], index: 7, kind: input, shape index: {}]
  %s8 = inlined_call_operand.vmem [shape: f32[1,64], index: 8, kind: input, shape index: {}]
  %s9 = inlined_call_operand.vmem [shape: f32[16,16], index: 9, kind: input, shape index: {}]
  %s10 = inlined_call_operand.vmem [shape: f32[1,16], index: 10, kind: input, shape index: {}]
  %s11 = inlined_call_operand.vmem [shape: f32[64,256], index: 11, kind: output, shape index: {}]
  %s12 = sld [smem:[#allocation0]]
  $region77: #{vae_gmm_forward.1} parent=0
    _
  %s14 = ssub.s32 1, %s12
  %s15 = scalar_select 0, %s14, %s12
  loop: start=0, step=1, limit=6
  $region2: #{vae_gmm_forward.1} parent=0 // loop_pre_header
    _
  $region3: #{vae_gmm_forward.1} parent=0 // loop_header
    %s17 = sphi 0, %s21
    %p18 = scmp.ge.s32.totalorder %s17, 6
    %s27 = sphi 0, %s29
    %s30 = sphi 0, %s27
    %s31 = sphi 0, %s30
    %s47 = sphi 0, %s31
    %s51 = sphi 0, %s51
    %s53 = sphi 0, %s51
    %s54 = sphi 0, %s53
    %s68 = sphi 0, %s54
    %s72 = sphi 0, %s72
    %s74 = sphi 0, %s72
    %s75 = sphi 0, %s74
    %s89 = sphi 0, %s75
    %s93 = sphi 0, %s93
    %s95 = sphi 0, %s93
    %s96 = sphi 0, %s95
    %s110 = sphi 0, %s96
    %s114 = sphi 0, %s114
    %s116 = sphi 0, %s114
    %s117 = sphi 0, %s116
    %s131 = sphi 0, %s117
    %s135 = sphi 0, %s135
    %s137 = sphi 0, %s135
    %s138 = sphi 0, %s137
    %s152 = sphi 0, %s138
    %s156 = sphi 0, %s156
    %s158 = sphi 0, %s156
    %s159 = sphi 0, %s158
    %s173 = sphi 0, %s159
    %s177 = sphi 0, %s177
    %s179 = sphi 0, %s177
    %s180 = sphi 0, %s179
    %s194 = sphi 0, %s180
    %s198 = sphi 0, %s198
    %s200 = sphi 0, %s198
    %s201 = sphi 0, %s200
    %s215 = sphi 0, %s201
    %s219 = sphi 0, %s219
    %s221 = sphi 0, %s219
    %s222 = sphi 0, %s221
    %s236 = sphi 0, %s222
    %s240 = sphi 0, %s240
    %s242 = sphi 0, %s240
    %s243 = sphi 0, %s242
    %s257 = sphi 0, %s243
    %s263 = sphi 0, %s265
    %s266 = sphi 0, %s263
    %s267 = sphi 0, %s266
    %s283 = sphi 0, %s267
  $region4: #{vae_gmm_forward.1} parent=0 // loop_header_branch
    %20 = sbr.rel (%p18) target = $region8
  $region5: #{vae_gmm_forward.1} parent=0 // loop_body
    %s22 = ssub.s32 %s17, 1
    %s23 = ssub.s32 %s17, 2
    %s24 = sadd.s32 %s17, 1
    %s25 = ssub.s32 %s17, %s24
    %p26 = scmp.eq.s32.totalorder %s25, 0
    %s28 = sadd.s32 %s27, 1
    %s29 = scalar_select %p26, %s27, %s28
    %p32 = pneg %p26
    %p33 = scmp.eq.s32.totalorder %s17, 3
    %p34 = por %p32, %p33
    %p35 = scmp.ne.s32.totalorder %s27, %s30
    %p36 = scmp.eq.s32.totalorder %s17, 0
    %p37 = por %p35, %p36
    %p38 = scmp.ne.s32.totalorder %s27, %s30
    %p39 = scmp.eq.s32.totalorder %s22, 3
    %p40 = por %p38, %p39
    %p41 = scmp.ne.s32.totalorder %s30, %s31
    %p42 = scmp.eq.s32.totalorder %s22, 0
    %p43 = por %p41, %p42
    %p44 = scmp.ne.s32.totalorder %s30, %s31
    %p45 = scmp.eq.s32.totalorder %s23, 3
    %p46 = por %p44, %p45
    %p48 = scmp.ne.s32.totalorder %s31, %s47
    %p49 = scmp.eq.s32.totalorder %s23, 0
    %p50 = por %p48, %p49
    %s52 = sadd.s32 %s51, 1
    %p55 = scmp.eq.s32.totalorder %s17, 3
    %p56 = scmp.ne.s32.totalorder %s51, %s53
    %p57 = scmp.eq.s32.totalorder %s17, 0
    %p58 = por %p56, %p57
    %p59 = scmp.ne.s32.totalorder %s51, %s53
    %p60 = scmp.eq.s32.totalorder %s22, 3
    %p61 = por %p59, %p60
    %p62 = scmp.ne.s32.totalorder %s53, %s54
    %p63 = scmp.eq.s32.totalorder %s22, 0
    %p64 = por %p62, %p63
    %p65 = scmp.ne.s32.totalorder %s53, %s54
    %p66 = scmp.eq.s32.totalorder %s23, 3
    %p67 = por %p65, %p66
    %p69 = scmp.ne.s32.totalorder %s54, %s68
    %p70 = scmp.eq.s32.totalorder %s23, 0
    %p71 = por %p69, %p70
    %s73 = sadd.s32 %s72, 1
    %p76 = scmp.eq.s32.totalorder %s17, 3
    %p77 = scmp.ne.s32.totalorder %s72, %s74
    %p78 = scmp.eq.s32.totalorder %s17, 0
    %p79 = por %p77, %p78
    %p80 = scmp.ne.s32.totalorder %s72, %s74
    %p81 = scmp.eq.s32.totalorder %s22, 3
    %p82 = por %p80, %p81
    %p83 = scmp.ne.s32.totalorder %s74, %s75
    %p84 = scmp.eq.s32.totalorder %s22, 0
    %p85 = por %p83, %p84
    %p86 = scmp.ne.s32.totalorder %s74, %s75
    %p87 = scmp.eq.s32.totalorder %s23, 3
    %p88 = por %p86, %p87
    %p90 = scmp.ne.s32.totalorder %s75, %s89
    %p91 = scmp.eq.s32.totalorder %s23, 0
    %p92 = por %p90, %p91
    %s94 = sadd.s32 %s93, 1
    %p97 = scmp.eq.s32.totalorder %s17, 3
    %p98 = scmp.ne.s32.totalorder %s93, %s95
    %p99 = scmp.eq.s32.totalorder %s17, 0
    %p100 = por %p98, %p99
    %p101 = scmp.ne.s32.totalorder %s93, %s95
    %p102 = scmp.eq.s32.totalorder %s22, 3
    %p103 = por %p101, %p102
    %p104 = scmp.ne.s32.totalorder %s95, %s96
    %p105 = scmp.eq.s32.totalorder %s22, 0
    %p106 = por %p104, %p105
    %p107 = scmp.ne.s32.totalorder %s95, %s96
    %p108 = scmp.eq.s32.totalorder %s23, 3
    %p109 = por %p107, %p108
    %p111 = scmp.ne.s32.totalorder %s96, %s110
    %p112 = scmp.eq.s32.totalorder %s23, 0
    %p113 = por %p111, %p112
    %s115 = sadd.s32 %s114, 1
    %p118 = scmp.eq.s32.totalorder %s17, 3
    %p119 = scmp.ne.s32.totalorder %s114, %s116
    %p120 = scmp.eq.s32.totalorder %s17, 0
    %p121 = por %p119, %p120
    %p122 = scmp.ne.s32.totalorder %s114, %s116
    %p123 = scmp.eq.s32.totalorder %s22, 3
    %p124 = por %p122, %p123
    %p125 = scmp.ne.s32.totalorder %s116, %s117
    %p126 = scmp.eq.s32.totalorder %s22, 0
    %p127 = por %p125, %p126
    %p128 = scmp.ne.s32.totalorder %s116, %s117
    %p129 = scmp.eq.s32.totalorder %s23, 3
    %p130 = por %p128, %p129
    %p132 = scmp.ne.s32.totalorder %s117, %s131
    %p133 = scmp.eq.s32.totalorder %s23, 0
    %p134 = por %p132, %p133
    %s136 = sadd.s32 %s135, 1
    %p139 = scmp.eq.s32.totalorder %s17, 3
    %p140 = scmp.ne.s32.totalorder %s135, %s137
    %p141 = scmp.eq.s32.totalorder %s17, 0
    %p142 = por %p140, %p141
    %p143 = scmp.ne.s32.totalorder %s135, %s137
    %p144 = scmp.eq.s32.totalorder %s22, 3
    %p145 = por %p143, %p144
    %p146 = scmp.ne.s32.totalorder %s137, %s138
    %p147 = scmp.eq.s32.totalorder %s22, 0
    %p148 = por %p146, %p147
    %p149 = scmp.ne.s32.totalorder %s137, %s138
    %p150 = scmp.eq.s32.totalorder %s23, 3
    %p151 = por %p149, %p150
    %p153 = scmp.ne.s32.totalorder %s138, %s152
    %p154 = scmp.eq.s32.totalorder %s23, 0
    %p155 = por %p153, %p154
    %s157 = sadd.s32 %s156, 1
    %p160 = scmp.eq.s32.totalorder %s17, 3
    %p161 = scmp.ne.s32.totalorder %s156, %s158
    %p162 = scmp.eq.s32.totalorder %s17, 0
    %p163 = por %p161, %p162
    %p164 = scmp.ne.s32.totalorder %s156, %s158
    %p165 = scmp.eq.s32.totalorder %s22, 3
    %p166 = por %p164, %p165
    %p167 = scmp.ne.s32.totalorder %s158, %s159
    %p168 = scmp.eq.s32.totalorder %s22, 0
    %p169 = por %p167, %p168
    %p170 = scmp.ne.s32.totalorder %s158, %s159
    %p171 = scmp.eq.s32.totalorder %s23, 3
    %p172 = por %p170, %p171
    %p174 = scmp.ne.s32.totalorder %s159, %s173
    %p175 = scmp.eq.s32.totalorder %s23, 0
    %p176 = por %p174, %p175
    %s178 = sadd.s32 %s177, 1
    %p181 = scmp.eq.s32.totalorder %s17, 3
    %p182 = scmp.ne.s32.totalorder %s177, %s179
    %p183 = scmp.eq.s32.totalorder %s17, 0
    %p184 = por %p182, %p183
    %p185 = scmp.ne.s32.totalorder %s177, %s179
    %p186 = scmp.eq.s32.totalorder %s22, 3
    %p187 = por %p185, %p186
    %p188 = scmp.ne.s32.totalorder %s179, %s180
    %p189 = scmp.eq.s32.totalorder %s22, 0
    %p190 = por %p188, %p189
    %p191 = scmp.ne.s32.totalorder %s179, %s180
    %p192 = scmp.eq.s32.totalorder %s23, 3
    %p193 = por %p191, %p192
    %p195 = scmp.ne.s32.totalorder %s180, %s194
    %p196 = scmp.eq.s32.totalorder %s23, 0
    %p197 = por %p195, %p196
    %s199 = sadd.s32 %s198, 1
    %p202 = scmp.eq.s32.totalorder %s17, 3
    %p203 = scmp.ne.s32.totalorder %s198, %s200
    %p204 = scmp.eq.s32.totalorder %s17, 0
    %p205 = por %p203, %p204
    %p206 = scmp.ne.s32.totalorder %s198, %s200
    %p207 = scmp.eq.s32.totalorder %s22, 3
    %p208 = por %p206, %p207
    %p209 = scmp.ne.s32.totalorder %s200, %s201
    %p210 = scmp.eq.s32.totalorder %s22, 0
    %p211 = por %p209, %p210
    %p212 = scmp.ne.s32.totalorder %s200, %s201
    %p213 = scmp.eq.s32.totalorder %s23, 3
    %p214 = por %p212, %p213
    %p216 = scmp.ne.s32.totalorder %s201, %s215
    %p217 = scmp.eq.s32.totalorder %s23, 0
    %p218 = por %p216, %p217
    %s220 = sadd.s32 %s219, 1
    %p223 = scmp.eq.s32.totalorder %s17, 3
    %p224 = scmp.ne.s32.totalorder %s219, %s221
    %p225 = scmp.eq.s32.totalorder %s17, 0
    %p226 = por %p224, %p225
    %p227 = scmp.ne.s32.totalorder %s219, %s221
    %p228 = scmp.eq.s32.totalorder %s22, 3
    %p229 = por %p227, %p228
    %p230 = scmp.ne.s32.totalorder %s221, %s222
    %p231 = scmp.eq.s32.totalorder %s22, 0
    %p232 = por %p230, %p231
    %p233 = scmp.ne.s32.totalorder %s221, %s222
    %p234 = scmp.eq.s32.totalorder %s23, 3
    %p235 = por %p233, %p234
    %p237 = scmp.ne.s32.totalorder %s222, %s236
    %p238 = scmp.eq.s32.totalorder %s23, 0
    %p239 = por %p237, %p238
    %s241 = sadd.s32 %s240, 1
    %p244 = scmp.eq.s32.totalorder %s17, 3
    %p245 = scmp.ne.s32.totalorder %s240, %s242
    %p246 = scmp.eq.s32.totalorder %s17, 0
    %p247 = por %p245, %p246
    %p248 = scmp.ne.s32.totalorder %s240, %s242
    %p249 = scmp.eq.s32.totalorder %s22, 3
    %p250 = por %p248, %p249
    %p251 = scmp.ne.s32.totalorder %s242, %s243
    %p252 = scmp.eq.s32.totalorder %s22, 0
    %p253 = por %p251, %p252
    %p254 = scmp.ne.s32.totalorder %s242, %s243
    %p255 = scmp.eq.s32.totalorder %s23, 3
    %p256 = por %p254, %p255
    %p258 = scmp.ne.s32.totalorder %s243, %s257
    %p259 = scmp.eq.s32.totalorder %s23, 0
    %p260 = por %p258, %p259
    %s261 = ssub.s32 %s17, %s24
    %p262 = scmp.eq.s32.totalorder %s261, 0
    %s264 = sadd.s32 %s263, 1
    %s265 = scalar_select %p262, %s263, %s264
    %p268 = pneg %p262
    %p269 = scmp.eq.s32.totalorder %s17, 3
    %p270 = por %p268, %p269
    %p271 = scmp.ne.s32.totalorder %s263, %s266
    %p272 = scmp.eq.s32.totalorder %s17, 0
    %p273 = por %p271, %p272
    %p274 = scmp.ne.s32.totalorder %s263, %s266
    %p275 = scmp.eq.s32.totalorder %s22, 3
    %p276 = por %p274, %p275
    %p277 = scmp.ne.s32.totalorder %s266, %s267
    %p278 = scmp.eq.s32.totalorder %s22, 0
    %p279 = por %p277, %p278
    %p280 = scmp.ne.s32.totalorder %s266, %s267
    %p281 = scmp.eq.s32.totalorder %s23, 3
    %p282 = por %p280, %p281
    %p284 = scmp.ne.s32.totalorder %s267, %s283
    %p285 = scmp.eq.s32.totalorder %s23, 0
    %p286 = por %p284, %p285
    %p287 = scmp.le.s32.totalorder 1, %s17
    %p288 = scmp.lt.s32.totalorder %s17, 5
    %p289 = pnand %p287, %p288
    %p290 = pneg %p289
    // Predicated region
    $region9: #{vae_gmm_forward.1} parent=5 // pred_check
      _
    $region10: #{vae_gmm_forward.1} parent=5 // pred_check_branch
      %292 = sbr.rel (%p289) target = $region12
    $region11: #{vae_gmm_forward.1} parent=5 // pred_region
      %s293 = ssub.s32 %s17, 1
      // Predicated region
      $region13: #{vae_gmm_forward.1} parent=11 // pred_check
        %p294 = pneg %p64
      $region14: #{vae_gmm_forward.1} parent=11 // pred_check_branch
        %296 = sbr.rel (%p294) target = $region16
      $region15: #{vae_gmm_forward.1} parent=11 // pred_region
        _
      $region16: #{vae_gmm_forward.1} parent=11 // pred_fallthru
        _
      // Predicated region
      $region17: #{vae_gmm_forward.1} parent=11 // pred_check
        %p297 = pneg %p85
      $region18: #{vae_gmm_forward.1} parent=11 // pred_check_branch
        %299 = sbr.rel (%p297) target = $region20
      $region19: #{vae_gmm_forward.1} parent=11 // pred_region
        _
      $region20: #{vae_gmm_forward.1} parent=11 // pred_fallthru
        _
      // Predicated region
      $region21: #{vae_gmm_forward.1} parent=11 // pred_check
        %p300 = pneg %p106
      $region22: #{vae_gmm_forward.1} parent=11 // pred_check_branch
        %302 = sbr.rel (%p300) target = $region24
      $region23: #{vae_gmm_forward.1} parent=11 // pred_region
        _
      $region24: #{vae_gmm_forward.1} parent=11 // pred_fallthru
        _
      // Predicated region
      $region25: #{vae_gmm_forward.1} parent=11 // pred_check
        %p303 = pneg %p127
      $region26: #{vae_gmm_forward.1} parent=11 // pred_check_branch
        %305 = sbr.rel (%p303) target = $region28
      $region27: #{vae_gmm_forward.1} parent=11 // pred_region
        _
      $region28: #{vae_gmm_forward.1} parent=11 // pred_fallthru
        _
      // Predicated region
      $region29: #{vae_gmm_forward.1} parent=11 // pred_check
        %p306 = pneg %p148
      $region30: #{vae_gmm_forward.1} parent=11 // pred_check_branch
        %308 = sbr.rel (%p306) target = $region32
      $region31: #{vae_gmm_forward.1} parent=11 // pred_region
        _
      $region32: #{vae_gmm_forward.1} parent=11 // pred_fallthru
        _
      // Predicated region
      $region33: #{vae_gmm_forward.1} parent=11 // pred_check
        %p309 = pneg %p169
      $region34: #{vae_gmm_forward.1} parent=11 // pred_check_branch
        %311 = sbr.rel (%p309) target = $region36
      $region35: #{vae_gmm_forward.1} parent=11 // pred_region
        _
      $region36: #{vae_gmm_forward.1} parent=11 // pred_fallthru
        _
      // Predicated region
      $region37: #{vae_gmm_forward.1} parent=11 // pred_check
        %p312 = pneg %p190
      $region38: #{vae_gmm_forward.1} parent=11 // pred_check_branch
        %314 = sbr.rel (%p312) target = $region40
      $region39: #{vae_gmm_forward.1} parent=11 // pred_region
        _
      $region40: #{vae_gmm_forward.1} parent=11 // pred_fallthru
        _
      // Predicated region
      $region41: #{vae_gmm_forward.1} parent=11 // pred_check
        %p315 = pneg %p211
      $region42: #{vae_gmm_forward.1} parent=11 // pred_check_branch
        %317 = sbr.rel (%p315) target = $region44
      $region43: #{vae_gmm_forward.1} parent=11 // pred_region
        _
      $region44: #{vae_gmm_forward.1} parent=11 // pred_fallthru
        _
      // Predicated region
      $region45: #{vae_gmm_forward.1} parent=11 // pred_check
        %p318 = pneg %p232
      $region46: #{vae_gmm_forward.1} parent=11 // pred_check_branch
        %320 = sbr.rel (%p318) target = $region48
      $region47: #{vae_gmm_forward.1} parent=11 // pred_region
        _
      $region48: #{vae_gmm_forward.1} parent=11 // pred_fallthru
        _
      // Predicated region
      $region49: #{vae_gmm_forward.1} parent=11 // pred_check
        %p321 = pneg %p253
      $region50: #{vae_gmm_forward.1} parent=11 // pred_check_branch
        %323 = sbr.rel (%p321) target = $region52
      $region51: #{vae_gmm_forward.1} parent=11 // pred_region
        _
      $region52: #{vae_gmm_forward.1} parent=11 // pred_fallthru
        _
    $region12: #{vae_gmm_forward.1} parent=5 // pred_fallthru
      _
    %p324 = scmp.lt.s32.totalorder %s17, 4
    // Predicated region
    $region53: #{vae_gmm_forward.1} parent=5 // pred_check
      %p325 = pneg %p324
    $region54: #{vae_gmm_forward.1} parent=5 // pred_check_branch
      %327 = sbr.rel (%p325) target = $region56
    $region55: #{vae_gmm_forward.1} parent=5 // pred_region
      // Predicated region
      $region57: #{vae_gmm_forward.1} parent=55 // pred_check
        %p328 = pneg %p37
      $region58: #{vae_gmm_forward.1} parent=55 // pred_check_branch
        %330 = sbr.rel (%p328) target = $region60
      $region59: #{vae_gmm_forward.1} parent=55 // pred_region
        %s331 = smul.u32 2, %s17
        %p332 = scmp.lt.s32.totalorder %s331, 7
        %s333 = scalar_select %p332, %s331, 7
        %s334 = smul.addr %s333, 8
        %s335 = scalar_lea.vmem %s0, %s334
        %s336 = smul.u32 2, %s17
      $region60: #{vae_gmm_forward.1} parent=55 // pred_fallthru
        _
    $region56: #{vae_gmm_forward.1} parent=5 // pred_fallthru
      _
    %p337 = scmp.le.s32.totalorder 1, %s17
    %p338 = scmp.lt.s32.totalorder %s17, 5
    %p339 = pnand %p337, %p338
    %p340 = pneg %p339
    // Predicated region
    $region61: #{vae_gmm_forward.1} parent=5 // pred_check
      _
    $region62: #{vae_gmm_forward.1} parent=5 // pred_check_branch
      %342 = sbr.rel (%p339) target = $region64
    $region63: #{vae_gmm_forward.1} parent=5 // pred_region
      %s343 = ssub.s32 %s17, 1
      %s344 = smul.u32 2, %s22
      %p345 = scmp.lt.s32.totalorder %s344, 7
      %s346 = scalar_select %p345, %s344, 7
      %s347 = smul.addr %s346, 8
      %s348 = scalar_lea.vmem %s0, %s347
      %p349 = pneg %p43
      %p350 = pneg %p40
      %p351 = pneg %p64
      %p352 = pneg %p61
      %p353 = pneg %p85
      %p354 = pneg %p82
      %p355 = pneg %p106
      %p356 = pneg %p103
      %p357 = pneg %p127
      %p358 = pneg %p124
      %p359 = pneg %p148
      %p360 = pneg %p145
      %p361 = pneg %p169
      %p362 = pneg %p166
      %p363 = pneg %p190
      %p364 = pneg %p187
      %p365 = pneg %p211
      %p366 = pneg %p208
      %p367 = pneg %p232
      %p368 = pneg %p229
      %p369 = pneg %p253
      %p370 = pneg %p250
      %p371 = pneg %p279
      %p372 = pneg %p276
      %s373 = smul.u32 2, %s22
      %p374 = scmp.lt.s32.totalorder %s373, 7
      %s375 = scalar_select %p374, %s373, 7
      %s376 = smul.addr %s375, 2
      %s377 = smul.addr %s376, 8
      %s378 = scalar_lea.vmem %s11, %s377
      %s379 = smul.u32 2, %s22
      %p380 = scmp.lt.s32.totalorder %s379, 7
      %s381 = scalar_select %p380, %s379, 7
      %s382 = smul.addr %s381, 8
      %s383 = scalar_lea.vmem %s0, %s382
      %s384 = smul.u32 2, %s22
      %s385 = smul.u32 2, %s22
      %p386 = scmp.lt.s32.totalorder %s385, 7
      %s387 = scalar_select %p386, %s385, 7
      %s388 = smul.addr %s387, 2
      %s389 = smul.addr %s388, 8
      %s390 = scalar_lea.vmem %s11, %s389
      %s391 = smul.u32 2, %s22
      %v392 = vld [vmem:[%s383] sm:$0xff]
      %v393 = vld [vmem:[%s383 + $0x8] sm:$0xff]
      %v394 = vld [vmem:[%s1] sm:$0xff]
      %v395 = vld [vmem:[%s1 + $0x8] sm:$0xff]
      %v396 = vld [vmem:[%s2] sm:$0x1]
      %v398 = vlaneseq
      %v399 = vshrl.u32 %v398, 7
      %v400 = vsub.s32 0, %v399
      %v401 = vrot.slane %v396, %v400
      %vm403 = vcmask 130048
      %v405 = vsel %vm403, %v392, 0
      %v408 = vsel %vm403, %v393, 0
      %410 = vmatprep.subr.mxu0 0.0
      %411 = vmatpush1.msra.mxu0 %v394
      %412 = vmatprep.subr.mxu0 0.0
      %413 = vmatpush1.msra.mxu0 %v395
      %414 = vmatprep.subr.mxu0 0.0
      %415 = vmatpush1.msra.mxu0 0.0
      %416 = vmatprep.subr.mxu0 0.0
      %417 = vmatpush1.msra.mxu0 0.0
      %418 = vmatprep.subr.mxu0 0.0
      %419 = vmatpush1.msra.mxu0 0.0
      %420 = vmatprep.subr.mxu0 0.0
      %421 = vmatpush1.msra.mxu0 0.0
      %422 = vmatprep.subr.mxu0 0.0
      %423 = vmatpush1.msra.mxu0 0.0
      %424 = vmatprep.subr.mxu0 0.0
      %425 = vmatpush1.msra.mxu0 0.0
      %426 = vmatprep.subr.mxu0 0.0
      %427 = vmatpush1.msra.mxu0 0.0
      %428 = vmatprep.subr.mxu0 0.0
      %429 = vmatpush1.msra.mxu0 0.0
      %430 = vmatprep.subr.mxu0 0.0
      %431 = vmatpush1.msra.mxu0 0.0
      %432 = vmatprep.subr.mxu0 0.0
      %433 = vmatpush1.msra.mxu0 0.0
      %434 = vmatprep.subr.mxu0 0.0
      %435 = vmatpush1.msra.mxu0 0.0
      %436 = vmatprep.subr.mxu0 0.0
      %437 = vmatpush1.msra.mxu0 0.0
      %438 = vmatprep.subr.mxu0 0.0
      %439 = vmatpush1.msra.mxu0 0.0
      %440 = vmatprep.subr.mxu0 0.0
      %441 = vmatpush1.msra.mxu0 0.0
      %442 = vmatprep.subr.mxu0 0.0
      %443 = vmatpush1.msra.mxu0 0.0
      %444 = vmatprep.subr.mxu0 0.0
      %445 = vmatpush1.msra.mxu0 0.0
      %446 = vmatprep.subr.mxu0 0.0
      %447 = vmatpush1.msra.mxu0 0.0
      %448 = vmatprep.subr.mxu0 0.0
      %449 = vmatpush1.msra.mxu0 0.0
      %450 = vmatprep.subr.mxu0 0.0
      %451 = vmatpush1.msra.mxu0 0.0
      %452 = vmatprep.subr.mxu0 0.0
      %453 = vmatpush1.msra.mxu0 0.0
      %454 = vmatprep.subr.mxu0 0.0
      %455 = vmatpush1.msra.mxu0 0.0
      %456 = vmatprep.subr.mxu0 0.0
      %457 = vmatpush1.msra.mxu0 0.0
      %458 = vmatprep.subr.mxu0 0.0
      %459 = vmatpush1.msra.mxu0 0.0
      %460 = vmatprep.subr.mxu0 0.0
      %461 = vmatpush1.msra.mxu0 0.0
      %462 = vmatprep.subr.mxu0 0.0
      %463 = vmatpush1.msra.mxu0 0.0
      %464 = vmatprep.subr.mxu0 0.0
      %465 = vmatpush1.msra.mxu0 0.0
      %466 = vmatprep.subr.mxu0 0.0
      %467 = vmatpush1.msra.mxu0 0.0
      %468 = vmatprep.subr.mxu0 0.0
      %469 = vmatpush1.msra.mxu0 0.0
      %470 = vmatprep.subr.mxu0 0.0
      %471 = vmatpush1.msra.mxu0 0.0
      %472 = vmatprep.subr.mxu0 0.0
      %473 = vmatpush1.msra.mxu0 0.0
      %474 = vmatprep.mubr.f32.mxu0 0.0
      %475 = vmatmul.mubr.f32.gmra.mrb[0].mxu0 %v405
      %v476 = vpop.f32.mrb[0].mxu0
      %v477 = vadd.f32 %v401, %v476
      %v478 = vpop.f32.mrb[0].mxu0
      %479 = vmatprep.mubr.f32.mxu0 0.0
      %480 = vmatmul.mubr.f32.gmra.mrb[0].mxu0 %v408
      %v481 = vpop.f32.mrb[0].mxu0
      %v482 = vadd.f32 %v401, %v481
      %v483 = vpop.f32.mrb[0].mxu0
      %484 = vdwg.mxu0
      %v485 = vxor.u32 %v477, 2147483648
      %v486 = vxor.u32 %v482, 2147483648
      %v487 = vmul.f32 %v485, 1.442695
      %v488 = vpow.pop %v487
      %v489 = vmul.f32 %v486, 1.442695
      %v490 = vpow.pop %v489
      %v491 = vadd.f32 %v488, 1.0
      %v492 = vadd.f32 %v490, 1.0
      %v493 = vrcp.pop %v491
      %v494 = vmul.f32 1.0, %v493
      %v495 = vrcp.pop %v492
      %v496 = vmul.f32 1.0, %v495
      %v497 = vld [vmem:[%s3] sm:$0xff]
      %v498 = vld [vmem:[%s3 + $0x8] sm:$0xff]
      %v499 = vld [vmem:[%s3 + $0x10] sm:$0xff]
      %v500 = vld [vmem:[%s3 + $0x18] sm:$0xff]
      %v501 = vld [vmem:[%s4] sm:$0x1]
      %v503 = vlaneseq
      %v504 = vshrl.u32 %v503, 7
      %v505 = vsub.s32 0, %v504
      %v506 = vrot.slane %v501, %v505
      %vm508 = vcmask 261120
      %v510 = vsel %vm508, %v494, 0
      %v513 = vsel %vm508, %v496, 0
      %515 = vmatprep.subr.mxu0 0.0
      %516 = vmatpush1.msra.mxu0 %v497
      %517 = vmatprep.subr.mxu0 0.0
      %518 = vmatpush1.msra.mxu0 %v498
      %519 = vmatprep.subr.mxu0 0.0
      %520 = vmatpush1.msra.mxu0 %v499
      %521 = vmatprep.subr.mxu0 0.0
      %522 = vmatpush1.msra.mxu0 %v500
      %523 = vmatprep.subr.mxu0 0.0
      %524 = vmatpush1.msra.mxu0 0.0
      %525 = vmatprep.subr.mxu0 0.0
      %526 = vmatpush1.msra.mxu0 0.0
      %527 = vmatprep.subr.mxu0 0.0
      %528 = vmatpush1.msra.mxu0 0.0
      %529 = vmatprep.subr.mxu0 0.0
      %530 = vmatpush1.msra.mxu0 0.0
      %531 = vmatprep.subr.mxu0 0.0
      %532 = vmatpush1.msra.mxu0 0.0
      %533 = vmatprep.subr.mxu0 0.0
      %534 = vmatpush1.msra.mxu0 0.0
      %535 = vmatprep.subr.mxu0 0.0
      %536 = vmatpush1.msra.mxu0 0.0
      %537 = vmatprep.subr.mxu0 0.0
      %538 = vmatpush1.msra.mxu0 0.0
      %539 = vmatprep.subr.mxu0 0.0
      %540 = vmatpush1.msra.mxu0 0.0
      %541 = vmatprep.subr.mxu0 0.0
      %542 = vmatpush1.msra.mxu0 0.0
      %543 = vmatprep.subr.mxu0 0.0
      %544 = vmatpush1.msra.mxu0 0.0
      %545 = vmatprep.subr.mxu0 0.0
      %546 = vmatpush1.msra.mxu0 0.0
      %547 = vmatprep.subr.mxu0 0.0
      %548 = vmatpush1.msra.mxu0 0.0
      %549 = vmatprep.subr.mxu0 0.0
      %550 = vmatpush1.msra.mxu0 0.0
      %551 = vmatprep.subr.mxu0 0.0
      %552 = vmatpush1.msra.mxu0 0.0
      %553 = vmatprep.subr.mxu0 0.0
      %554 = vmatpush1.msra.mxu0 0.0
      %555 = vmatprep.subr.mxu0 0.0
      %556 = vmatpush1.msra.mxu0 0.0
      %557 = vmatprep.subr.mxu0 0.0
      %558 = vmatpush1.msra.mxu0 0.0
      %559 = vmatprep.subr.mxu0 0.0
      %560 = vmatpush1.msra.mxu0 0.0
      %561 = vmatprep.subr.mxu0 0.0
      %562 = vmatpush1.msra.mxu0 0.0
      %563 = vmatprep.subr.mxu0 0.0
      %564 = vmatpush1.msra.mxu0 0.0
      %565 = vmatprep.subr.mxu0 0.0
      %566 = vmatpush1.msra.mxu0 0.0
      %567 = vmatprep.subr.mxu0 0.0
      %568 = vmatpush1.msra.mxu0 0.0
      %569 = vmatprep.subr.mxu0 0.0
      %570 = vmatpush1.msra.mxu0 0.0
      %571 = vmatprep.subr.mxu0 0.0
      %572 = vmatpush1.msra.mxu0 0.0
      %573 = vmatprep.subr.mxu0 0.0
      %574 = vmatpush1.msra.mxu0 0.0
      %575 = vmatprep.subr.mxu0 0.0
      %576 = vmatpush1.msra.mxu0 0.0
      %577 = vmatprep.subr.mxu0 0.0
      %578 = vmatpush1.msra.mxu0 0.0
      %579 = vmatprep.mubr.f32.mxu0 0.0
      %580 = vmatmul.mubr.f32.gmra.mrb[0].mxu0 %v510
      %v581 = vpop.f32.mrb[0].mxu0
      %v582 = vadd.f32 %v506, %v581
      %v583 = vpop.f32.mrb[0].mxu0
      %584 = vmatprep.mubr.f32.mxu0 0.0
      %585 = vmatmul.mubr.f32.gmra.mrb[0].mxu0 %v513
      %v586 = vpop.f32.mrb[0].mxu0
      %v587 = vadd.f32 %v506, %v586
      %v588 = vpop.f32.mrb[0].mxu0
      %589 = vdwg.mxu0
      %v590 = vmul.f32 %v582, 1.442695
      %v591 = vpow.pop %v590
      %v592 = vmul.f32 %v587, 1.442695
      %v593 = vpow.pop %v592
      %vm594 = vcmask 556544
      %v595 = vsel %vm594, %v591, -inf
      %596 = vmax.xlane.f32.xlu0 %v595
      %v597 = vpop.xlane.xlu0 %596
      %v598 = vsel %vm594, %v593, -inf
      %599 = vmax.xlane.f32.xlu0 %v598
      %v600 = vpop.xlane.xlu0 %599
      %v601 = vsub.f32 %v591, %v597
      %v602 = vsub.f32 %v593, %v600
      %v603 = vmul.f32 %v601, 1.442695
      %v604 = vpow.pop %v603
      %v605 = vmul.f32 %v602, 1.442695
      %v606 = vpow.pop %v605
      %609 = vrot.lane.b32.xlu0 %v604, 64
      %v610 = vpop.permute.xlu0 %609
      %611 = vrot.lane.b32.xlu0 %v606, 64
      %v612 = vpop.permute.xlu0 %611
      %vm615 = vcmask 31744
      %v616 = vsel %vm615, %v610, 0.0
      %617 = vadd.xlane.f32.xlu0 %v616
      %v618 = vpop.xlane.xlu0 %617
      %v619 = vsel %vm615, %v612, 0.0
      %620 = vadd.xlane.f32.xlu0 %v619
      %v621 = vpop.xlane.xlu0 %620
      %v622 = vrcp.pop %v618
      %v623 = vmul.f32 1.0, %v622
      %v624 = vrcp.pop %v621
      %v625 = vmul.f32 1.0, %v624
      %v626 = vmul.f32 %v604, %v623
      %v627 = vmul.f32 %v606, %v625
      %v628 = vlog2.pop %v618
      %v629 = vmul.f32 %v628, 0.6931472
      %v630 = vlog2.pop %v621
      %v631 = vmul.f32 %v630, 0.6931472
      %v632 = vsub.f32 %v601, %v629
      %v633 = vsub.f32 %v602, %v631
      %634 = vrot.lane.b32.xlu0 %v392, 48
      %v635 = vpop.permute.xlu0 %634
      %636 = vrot.lane.b32.xlu0 %v393, 48
      %v637 = vpop.permute.xlu0 %636
      %v640 = vadd.f32 %v632, %v635
      %v641 = vadd.f32 %v633, %v637
      %v642 = vlaneseq
      %v643 = vand.u32 %v642, 127
      %v644 = vsel %vm594, %v640, -inf
      %645 = vmax.xlane.f32.xlu0 %v644
      %v646 = vpop.xlane.xlu0 %645
      %v647 = vsel %vm594, %v641, -inf
      %648 = vmax.xlane.f32.xlu0 %v647
      %v649 = vpop.xlane.xlu0 %648
      %vm650 = vcmp.ge.f32.partialorder %v640, %v646
      %vm651 = vcmp.ge.f32.partialorder %v641, %v649
      %652 = vrot.lane.b32.xlu0 %v643, 64
      %v653 = vpop.permute.xlu0 %652
      %v654 = vsel %vm650, %v653, 4
      %v655 = vsel %vm651, %v653, 4
      %v656 = vsel %vm594, %v654, 2147483647
      %v657 = vand.u32 %v656, 65535
      %v658 = vshra.s32 %v656, 16
      %v659 = vcvt.s32.f32 %v657
      %v660 = vcvt.s32.f32 %v658
      %661 = vmin.xlane.f32.xlu0 %v660
      %v662 = vpop.xlane.xlu0 %661
      %vm663 = vcmp.eq.f32.partialorder %v660, %v662
      %v664 = vsel %vm663, %v659, inf
      %665 = vmin.xlane.f32.xlu0 %v664
      %v666 = vpop.xlane.xlu0 %665
      %v667 = vcvt.f32.s32 %v666
      %v668 = vcvt.f32.s32 %v662
      %v669 = vshll.u32 %v668, 16
      %v670 = vadd.s32 %v669, %v667
      %v671 = vsel %vm594, %v655, 2147483647
      %v672 = vand.u32 %v671, 65535
      %v673 = vshra.s32 %v671, 16
      %v674 = vcvt.s32.f32 %v672
      %v675 = vcvt.s32.f32 %v673
      %676 = vmin.xlane.f32.xlu0 %v675
      %v677 = vpop.xlane.xlu0 %676
      %vm678 = vcmp.eq.f32.partialorder %v675, %v677
      %v679 = vsel %vm678, %v674, inf
      %680 = vmin.xlane.f32.xlu0 %v679
      %v681 = vpop.xlane.xlu0 %680
      %v682 = vcvt.f32.s32 %v681
      %v683 = vcvt.f32.s32 %v677
      %v684 = vshll.u32 %v683, 16
      %v685 = vadd.s32 %v684, %v682
      %vm686 = vcmp.eq.s32.totalorder %v643, %v670
      %vm687 = vcmp.eq.s32.totalorder %v643, %v685
      %v688 = vsel %vm686, 1, 0
      %v689 = vsel %vm687, 1, 0
      %v690 = vcvt.s32.f32 %v688
      %v691 = vcvt.s32.f32 %v689
      %v692 = vmul.f32 %v582, 0.5
      %v693 = vmul.f32 %v587, 0.5
      %v694 = vmul.f32 %v692, 1.442695
      %v695 = vpow.pop %v694
      %v696 = vmul.f32 %v693, 1.442695
      %v697 = vpow.pop %v696
      %698 = vrot.lane.b32.xlu0 %v392, 12
      %v699 = vpop.permute.xlu0 %698
      %700 = vrot.lane.b32.xlu0 %v393, 12
      %v701 = vpop.permute.xlu0 %700
      %v704 = vmul.f32 %v695, %v699
      %v705 = vmul.f32 %v697, %v701
      %708 = vrot.lane.b32.xlu0 %v704, 96
      %v709 = vpop.permute.xlu0 %708
      %710 = vrot.lane.b32.xlu0 %v705, 96
      %v711 = vpop.permute.xlu0 %710
      %v714 = vadd.f32 %v582, %v709
      %v715 = vadd.f32 %v587, %v711
      %v716 = vld [vmem:[%s5] sm:$0xff]
      %v717 = vld [vmem:[%s5 + $0x8] sm:$0xff]
      %v718 = vld [vmem:[%s5 + $0x10] sm:$0xff]
      %v719 = vld [vmem:[%s5 + $0x18] sm:$0xff]
      %v720 = vld [vmem:[%s6] sm:$0x1]
      %v722 = vlaneseq
      %v723 = vshrl.u32 %v722, 7
      %v724 = vsub.s32 0, %v723
      %v725 = vrot.slane %v720, %v724
      %v728 = vsel %vm508, %v714, 0
      %v731 = vsel %vm508, %v715, 0
      %733 = vmatprep.subr.mxu0 0.0
      %734 = vmatpush1.msra.mxu0 %v716
      %735 = vmatprep.subr.mxu0 0.0
      %736 = vmatpush1.msra.mxu0 %v717
      %737 = vmatprep.subr.mxu0 0.0
      %738 = vmatpush1.msra.mxu0 %v718
      %739 = vmatprep.subr.mxu0 0.0
      %740 = vmatpush1.msra.mxu0 %v719
      %741 = vmatprep.subr.mxu0 0.0
      %742 = vmatpush1.msra.mxu0 0.0
      %743 = vmatprep.subr.mxu0 0.0
      %744 = vmatpush1.msra.mxu0 0.0
      %745 = vmatprep.subr.mxu0 0.0
      %746 = vmatpush1.msra.mxu0 0.0
      %747 = vmatprep.subr.mxu0 0.0
      %748 = vmatpush1.msra.mxu0 0.0
      %749 = vmatprep.subr.mxu0 0.0
      %750 = vmatpush1.msra.mxu0 0.0
      %751 = vmatprep.subr.mxu0 0.0
      %752 = vmatpush1.msra.mxu0 0.0
      %753 = vmatprep.subr.mxu0 0.0
      %754 = vmatpush1.msra.mxu0 0.0
      %755 = vmatprep.subr.mxu0 0.0
      %756 = vmatpush1.msra.mxu0 0.0
      %757 = vmatprep.subr.mxu0 0.0
      %758 = vmatpush1.msra.mxu0 0.0
      %759 = vmatprep.subr.mxu0 0.0
      %760 = vmatpush1.msra.mxu0 0.0
      %761 = vmatprep.subr.mxu0 0.0
      %762 = vmatpush1.msra.mxu0 0.0
      %763 = vmatprep.subr.mxu0 0.0
      %764 = vmatpush1.msra.mxu0 0.0
      %765 = vmatprep.subr.mxu0 0.0
      %766 = vmatpush1.msra.mxu0 0.0
      %767 = vmatprep.subr.mxu0 0.0
      %768 = vmatpush1.msra.mxu0 0.0
      %769 = vmatprep.subr.mxu0 0.0
      %770 = vmatpush1.msra.mxu0 0.0
      %771 = vmatprep.subr.mxu0 0.0
      %772 = vmatpush1.msra.mxu0 0.0
      %773 = vmatprep.subr.mxu0 0.0
      %774 = vmatpush1.msra.mxu0 0.0
      %775 = vmatprep.subr.mxu0 0.0
      %776 = vmatpush1.msra.mxu0 0.0
      %777 = vmatprep.subr.mxu0 0.0
      %778 = vmatpush1.msra.mxu0 0.0
      %779 = vmatprep.subr.mxu0 0.0
      %780 = vmatpush1.msra.mxu0 0.0
      %781 = vmatprep.subr.mxu0 0.0
      %782 = vmatpush1.msra.mxu0 0.0
      %783 = vmatprep.subr.mxu0 0.0
      %784 = vmatpush1.msra.mxu0 0.0
      %785 = vmatprep.subr.mxu0 0.0
      %786 = vmatpush1.msra.mxu0 0.0
      %787 = vmatprep.subr.mxu0 0.0
      %788 = vmatpush1.msra.mxu0 0.0
      %789 = vmatprep.subr.mxu0 0.0
      %790 = vmatpush1.msra.mxu0 0.0
      %791 = vmatprep.subr.mxu0 0.0
      %792 = vmatpush1.msra.mxu0 0.0
      %793 = vmatprep.subr.mxu0 0.0
      %794 = vmatpush1.msra.mxu0 0.0
      %795 = vmatprep.subr.mxu0 0.0
      %796 = vmatpush1.msra.mxu0 0.0
      %797 = vmatprep.mubr.f32.mxu0 0.0
      %798 = vmatmul.mubr.f32.gmra.mrb[0].mxu0 %v728
      %v799 = vpop.f32.mrb[0].mxu0
      %v800 = vadd.f32 %v725, %v799
      %v801 = vpop.f32.mrb[0].mxu0
      %802 = vmatprep.mubr.f32.mxu0 0.0
      %803 = vmatmul.mubr.f32.gmra.mrb[0].mxu0 %v731
      %v804 = vpop.f32.mrb[0].mxu0
      %v805 = vadd.f32 %v725, %v804
      %v806 = vpop.f32.mrb[0].mxu0
      %807 = vdwg.mxu0
      %v808 = vxor.u32 %v800, 2147483648
      %v809 = vxor.u32 %v805, 2147483648
      %v810 = vmul.f32 %v808, 1.442695
      %v811 = vpow.pop %v810
      %v812 = vmul.f32 %v809, 1.442695
      %v813 = vpow.pop %v812
      %v814 = vadd.f32 %v811, 1.0
      %v815 = vadd.f32 %v813, 1.0
      %v816 = vrcp.pop %v814
      %v817 = vmul.f32 1.0, %v816
      %v818 = vrcp.pop %v815
      %v819 = vmul.f32 1.0, %v818
      %v820 = vld [vmem:[%s7] sm:$0xff]
      %v821 = vld [vmem:[%s7 + $0x8] sm:$0xff]
      %v822 = vld [vmem:[%s7 + $0x10] sm:$0xff]
      %v823 = vld [vmem:[%s7 + $0x18] sm:$0xff]
      %v824 = vld [vmem:[%s7 + $0x20] sm:$0xff]
      %v825 = vld [vmem:[%s7 + $0x28] sm:$0xff]
      %v826 = vld [vmem:[%s7 + $0x30] sm:$0xff]
      %v827 = vld [vmem:[%s7 + $0x38] sm:$0xff]
      %v828 = vld [vmem:[%s7 + $0x40] sm:$0xff]
      %v829 = vld [vmem:[%s7 + $0x48] sm:$0xff]
      %v830 = vld [vmem:[%s7 + $0x50] sm:$0xff]
      %v831 = vld [vmem:[%s7 + $0x58] sm:$0xff]
      %v832 = vld [vmem:[%s7 + $0x60] sm:$0xff]
      %v833 = vld [vmem:[%s7 + $0x68] sm:$0xff]
      %v834 = vld [vmem:[%s7 + $0x70] sm:$0xff]
      %v835 = vld [vmem:[%s7 + $0x78] sm:$0xff]
      %v836 = vld [vmem:[%s8] sm:$0x1]
      %v838 = vlaneseq
      %v839 = vshrl.u32 %v838, 7
      %v840 = vsub.s32 0, %v839
      %v841 = vrot.slane %v836, %v840
      %843 = vmatprep.subr.mxu0 0.0
      %844 = vmatpush1.msra.mxu0 %v820
      %845 = vmatprep.subr.mxu0 0.0
      %846 = vmatpush1.msra.mxu0 %v821
      %847 = vmatprep.subr.mxu0 0.0
      %848 = vmatpush1.msra.mxu0 %v822
      %849 = vmatprep.subr.mxu0 0.0
      %850 = vmatpush1.msra.mxu0 %v823
      %851 = vmatprep.subr.mxu0 0.0
      %852 = vmatpush1.msra.mxu0 %v824
      %853 = vmatprep.subr.mxu0 0.0
      %854 = vmatpush1.msra.mxu0 %v825
      %855 = vmatprep.subr.mxu0 0.0
      %856 = vmatpush1.msra.mxu0 %v826
      %857 = vmatprep.subr.mxu0 0.0
      %858 = vmatpush1.msra.mxu0 %v827
      %859 = vmatprep.subr.mxu0 0.0
      %860 = vmatpush1.msra.mxu0 %v828
      %861 = vmatprep.subr.mxu0 0.0
      %862 = vmatpush1.msra.mxu0 %v829
      %863 = vmatprep.subr.mxu0 0.0
      %864 = vmatpush1.msra.mxu0 %v830
      %865 = vmatprep.subr.mxu0 0.0
      %866 = vmatpush1.msra.mxu0 %v831
      %867 = vmatprep.subr.mxu0 0.0
      %868 = vmatpush1.msra.mxu0 %v832
      %869 = vmatprep.subr.mxu0 0.0
      %870 = vmatpush1.msra.mxu0 %v833
      %871 = vmatprep.subr.mxu0 0.0
      %872 = vmatpush1.msra.mxu0 %v834
      %873 = vmatprep.subr.mxu0 0.0
      %874 = vmatpush1.msra.mxu0 %v835
      %875 = vmatprep.subr.mxu0 0.0
      %876 = vmatpush1.msra.mxu0 0.0
      %877 = vmatprep.subr.mxu0 0.0
      %878 = vmatpush1.msra.mxu0 0.0
      %879 = vmatprep.subr.mxu0 0.0
      %880 = vmatpush1.msra.mxu0 0.0
      %881 = vmatprep.subr.mxu0 0.0
      %882 = vmatpush1.msra.mxu0 0.0
      %883 = vmatprep.subr.mxu0 0.0
      %884 = vmatpush1.msra.mxu0 0.0
      %885 = vmatprep.subr.mxu0 0.0
      %886 = vmatpush1.msra.mxu0 0.0
      %887 = vmatprep.subr.mxu0 0.0
      %888 = vmatpush1.msra.mxu0 0.0
      %889 = vmatprep.subr.mxu0 0.0
      %890 = vmatpush1.msra.mxu0 0.0
      %891 = vmatprep.subr.mxu0 0.0
      %892 = vmatpush1.msra.mxu0 0.0
      %893 = vmatprep.subr.mxu0 0.0
      %894 = vmatpush1.msra.mxu0 0.0
      %895 = vmatprep.subr.mxu0 0.0
      %896 = vmatpush1.msra.mxu0 0.0
      %897 = vmatprep.subr.mxu0 0.0
      %898 = vmatpush1.msra.mxu0 0.0
      %899 = vmatprep.subr.mxu0 0.0
      %900 = vmatpush1.msra.mxu0 0.0
      %901 = vmatprep.subr.mxu0 0.0
      %902 = vmatpush1.msra.mxu0 0.0
      %903 = vmatprep.subr.mxu0 0.0
      %904 = vmatpush1.msra.mxu0 0.0
      %905 = vmatprep.subr.mxu0 0.0
      %906 = vmatpush1.msra.mxu0 0.0
      %907 = vmatprep.mubr.f32.mxu0 0.0
      %908 = vmatmul.mubr.f32.gmra.mrb[0].mxu0 %v817
      %v909 = vpop.f32.mrb[0].mxu0
      %v910 = vadd.f32 %v841, %v909
      %v911 = vpop.f32.mrb[0].mxu0
      %912 = vmatprep.mubr.f32.mxu0 0.0
      %913 = vmatmul.mubr.f32.gmra.mrb[0].mxu0 %v819
      %v914 = vpop.f32.mrb[0].mxu0
      %v915 = vadd.f32 %v841, %v914
      %v916 = vpop.f32.mrb[0].mxu0
      %917 = vdwg.mxu0
      %v918 = vxor.u32 %v910, 2147483648
      %v919 = vxor.u32 %v915, 2147483648
      %v920 = vmul.f32 %v918, 1.442695
      %v921 = vpow.pop %v920
      %v922 = vmul.f32 %v919, 1.442695
      %v923 = vpow.pop %v922
      %v924 = vadd.f32 %v921, 1.0
      %v925 = vadd.f32 %v923, 1.0
      %v926 = vrcp.pop %v924
      %v927 = vmul.f32 1.0, %v926
      %v928 = vrcp.pop %v925
      %v929 = vmul.f32 1.0, %v928
      %931 = vset.pattern.permute.xlu0 0
      %932 = vperm.xlu0 %931, %v690
      %v933 = vpop.permute.xlu0 %932
      %936 = vset.pattern.permute.xlu0 0
      %937 = vperm.xlu0 %936, %v691
      %v938 = vpop.permute.xlu0 %937
      %v940 = vmul.f32 %v927, %v933
      %v941 = vmul.f32 %v929, %v938
      %942 = vset.pattern.permute.xlu0 1
      %943 = vperm.xlu0 %942, %v690
      %v944 = vpop.permute.xlu0 %943
      %946 = vset.pattern.permute.xlu0 1
      %947 = vperm.xlu0 %946, %v691
      %v948 = vpop.permute.xlu0 %947
      %v950 = vmul.f32 %v927, %v944
      %v951 = vmul.f32 %v929, %v948
      %954 = vrot.lane.b32.xlu0 %v950, 112
      %v955 = vpop.permute.xlu0 %954
      %956 = vrot.lane.b32.xlu0 %v951, 112
      %v957 = vpop.permute.xlu0 %956
      %v960 = vadd.f32 %v940, %v955
      %v961 = vadd.f32 %v941, %v957
      %962 = vset.pattern.permute.xlu0 2
      %963 = vperm.xlu0 %962, %v690
      %v964 = vpop.permute.xlu0 %963
      %966 = vset.pattern.permute.xlu0 2
      %967 = vperm.xlu0 %966, %v691
      %v968 = vpop.permute.xlu0 %967
      %v970 = vmul.f32 %v927, %v964
      %v971 = vmul.f32 %v929, %v968
      %974 = vrot.lane.b32.xlu0 %v970, 96
      %v975 = vpop.permute.xlu0 %974
      %976 = vrot.lane.b32.xlu0 %v971, 96
      %v977 = vpop.permute.xlu0 %976
      %v980 = vadd.f32 %v960, %v975
      %v981 = vadd.f32 %v961, %v977
      %982 = vset.pattern.permute.xlu0 3
      %983 = vperm.xlu0 %982, %v690
      %v984 = vpop.permute.xlu0 %983
      %986 = vset.pattern.permute.xlu0 3
      %987 = vperm.xlu0 %986, %v691
      %v988 = vpop.permute.xlu0 %987
      %v990 = vmul.f32 %v927, %v984
      %v991 = vmul.f32 %v929, %v988
      %994 = vrot.lane.b32.xlu0 %v990, 80
      %v995 = vpop.permute.xlu0 %994
      %996 = vrot.lane.b32.xlu0 %v991, 80
      %v997 = vpop.permute.xlu0 %996
      %v1000 = vadd.f32 %v980, %v995
      %v1001 = vadd.f32 %v981, %v997
      %v1002 = vld [vmem:[%s9] sm:$0xff]
      %v1003 = vld [vmem:[%s9 + $0x8] sm:$0xff]
      %v1004 = vld [vmem:[%s10] sm:$0x1]
      %v1006 = vlaneseq
      %v1007 = vshrl.u32 %v1006, 7
      %v1008 = vsub.s32 0, %v1007
      %v1009 = vrot.slane %v1004, %v1008
      %v1012 = vsel %vm403, %v1000, 0
      %v1015 = vsel %vm403, %v1001, 0
      %1017 = vmatprep.subr.mxu0 0.0
      %1018 = vmatpush1.msra.mxu0 %v1002
      %1019 = vmatprep.subr.mxu0 0.0
      %1020 = vmatpush1.msra.mxu0 %v1003
      %1021 = vmatprep.subr.mxu0 0.0
      %1022 = vmatpush1.msra.mxu0 0.0
      %1023 = vmatprep.subr.mxu0 0.0
      %1024 = vmatpush1.msra.mxu0 0.0
      %1025 = vmatprep.subr.mxu0 0.0
      %1026 = vmatpush1.msra.mxu0 0.0
      %1027 = vmatprep.subr.mxu0 0.0
      %1028 = vmatpush1.msra.mxu0 0.0
      %1029 = vmatprep.subr.mxu0 0.0
      %1030 = vmatpush1.msra.mxu0 0.0
      %1031 = vmatprep.subr.mxu0 0.0
      %1032 = vmatpush1.msra.mxu0 0.0
      %1033 = vmatprep.subr.mxu0 0.0
      %1034 = vmatpush1.msra.mxu0 0.0
      %1035 = vmatprep.subr.mxu0 0.0
      %1036 = vmatpush1.msra.mxu0 0.0
      %1037 = vmatprep.subr.mxu0 0.0
      %1038 = vmatpush1.msra.mxu0 0.0
      %1039 = vmatprep.subr.mxu0 0.0
      %1040 = vmatpush1.msra.mxu0 0.0
      %1041 = vmatprep.subr.mxu0 0.0
      %1042 = vmatpush1.msra.mxu0 0.0
      %1043 = vmatprep.subr.mxu0 0.0
      %1044 = vmatpush1.msra.mxu0 0.0
      %1045 = vmatprep.subr.mxu0 0.0
      %1046 = vmatpush1.msra.mxu0 0.0
      %1047 = vmatprep.subr.mxu0 0.0
      %1048 = vmatpush1.msra.mxu0 0.0
      %1049 = vmatprep.subr.mxu0 0.0
      %1050 = vmatpush1.msra.mxu0 0.0
      %1051 = vmatprep.subr.mxu0 0.0
      %1052 = vmatpush1.msra.mxu0 0.0
      %1053 = vmatprep.subr.mxu0 0.0
      %1054 = vmatpush1.msra.mxu0 0.0
      %1055 = vmatprep.subr.mxu0 0.0
      %1056 = vmatpush1.msra.mxu0 0.0
      %1057 = vmatprep.subr.mxu0 0.0
      %1058 = vmatpush1.msra.mxu0 0.0
      %1059 = vmatprep.subr.mxu0 0.0
      %1060 = vmatpush1.msra.mxu0 0.0
      %1061 = vmatprep.subr.mxu0 0.0
      %1062 = vmatpush1.msra.mxu0 0.0
      %1063 = vmatprep.subr.mxu0 0.0
      %1064 = vmatpush1.msra.mxu0 0.0
      %1065 = vmatprep.subr.mxu0 0.0
      %1066 = vmatpush1.msra.mxu0 0.0
      %1067 = vmatprep.subr.mxu0 0.0
      %1068 = vmatpush1.msra.mxu0 0.0
      %1069 = vmatprep.subr.mxu0 0.0
      %1070 = vmatpush1.msra.mxu0 0.0
      %1071 = vmatprep.subr.mxu0 0.0
      %1072 = vmatpush1.msra.mxu0 0.0
      %1073 = vmatprep.subr.mxu0 0.0
      %1074 = vmatpush1.msra.mxu0 0.0
      %1075 = vmatprep.subr.mxu0 0.0
      %1076 = vmatpush1.msra.mxu0 0.0
      %1077 = vmatprep.subr.mxu0 0.0
      %1078 = vmatpush1.msra.mxu0 0.0
      %1079 = vmatprep.subr.mxu0 0.0
      %1080 = vmatpush1.msra.mxu0 0.0
      %1081 = vmatprep.mubr.f32.mxu0 0.0
      %1082 = vmatmul.mubr.f32.gmra.mrb[0].mxu0 %v1012
      %v1083 = vpop.f32.mrb[0].mxu0
      %v1084 = vadd.f32 %v1009, %v1083
      %v1085 = vpop.f32.mrb[0].mxu0
      %1086 = vmatprep.mubr.f32.mxu0 0.0
      %1087 = vmatmul.mubr.f32.gmra.mrb[0].mxu0 %v1015
      %v1088 = vpop.f32.mrb[0].mxu0
      %v1089 = vadd.f32 %v1009, %v1088
      %v1090 = vpop.f32.mrb[0].mxu0
      %1091 = vdwg.mxu0
      %1092 = vrot.lane.b32.xlu0 %v1000, 16
      %v1093 = vpop.permute.xlu0 %1092
      %1094 = vrot.lane.b32.xlu0 %v1001, 16
      %v1095 = vpop.permute.xlu0 %1094
      %1098 = vrot.lane.b32.xlu0 %v714, 32
      %v1099 = vpop.permute.xlu0 %1098
      %1100 = vrot.lane.b32.xlu0 %v715, 32
      %v1101 = vpop.permute.xlu0 %1100
      %1106 = vrot.lane.b32.xlu0 %v582, 64
      %v1107 = vpop.permute.xlu0 %1106
      %1108 = vrot.lane.b32.xlu0 %v587, 64
      %v1109 = vpop.permute.xlu0 %1108
      %1114 = vrot.lane.b32.xlu0 %v626, 64
      %v1115 = vpop.permute.xlu0 %1114
      %1116 = vrot.lane.b32.xlu0 %v627, 64
      %v1117 = vpop.permute.xlu0 %1116
      %1120 = vrot.lane.b32.xlu0 %v690, 4
      %v1121 = vpop.permute.xlu0 %1120
      %1122 = vrot.lane.b32.xlu0 %v691, 4
      %v1123 = vpop.permute.xlu0 %1122
      %v1126 = vsel %vm403, %v1084, %v1093
      %v1127 = vsel %vm403, %v1089, %v1095
      %v1128 = vsel %vm508, %v1126, %v1099
      %v1129 = vsel %vm508, %v1127, %v1101
      %vm1130 = vcmask 523264
      %v1131 = vsel %vm1130, %v1128, %v1107
      %v1132 = vsel %vm1130, %v1129, %v1109
      %vm1133 = vcmask 785408
      %v1134 = vsel %vm1133, %v1131, %v1107
      %v1135 = vsel %vm1133, %v1132, %v1109
      %v1136 = vsel %vm615, %v1115, %v1121
      %v1137 = vsel %vm615, %v1117, %v1123
      %vm1138 = vcmask 64512
      %v1139 = vsel %vm1138, %v1136, 0.0
      %v1140 = vsel %vm1138, %v1137, 0.0
      %1141 = vst [vmem:[%s390] sm:$0xff] %v1134
      %1142 = vst [vmem:[%s390 + $0x8] sm:$0xff] %v1139
      %1143 = vst [vmem:[%s390 + $0x10] sm:$0xff] %v1135
      %1144 = vst [vmem:[%s390 + $0x18] sm:$0xff] %v1140
      %s1145 = smul.u32 2, %s22
      %p1146 = scmp.lt.s32.totalorder %s1145, 7
      %s1147 = scalar_select %p1146, %s1145, 7
      %s1148 = smul.addr %s1147, 2
      %s1149 = smul.addr %s1148, 8
      %s1150 = scalar_lea.vmem %s11, %s1149
      // Predicated region
      $region65: #{vae_gmm_forward.1} parent=63 // pred_check
        %p1151 = pneg %p276
      $region66: #{vae_gmm_forward.1} parent=63 // pred_check_branch
        %1153 = sbr.rel (%p1151) target = $region68
      $region67: #{vae_gmm_forward.1} parent=63 // pred_region
        %s1154 = smul.u32 2, %s22
      $region68: #{vae_gmm_forward.1} parent=63 // pred_fallthru
        _
    $region64: #{vae_gmm_forward.1} parent=5 // pred_fallthru
      _
    %p1155 = scmp.le.s32.totalorder 2, %s17
    // Predicated region
    $region69: #{vae_gmm_forward.1} parent=5 // pred_check
      %p1156 = pneg %p1155
    $region70: #{vae_gmm_forward.1} parent=5 // pred_check_branch
      %1158 = sbr.rel (%p1156) target = $region72
    $region71: #{vae_gmm_forward.1} parent=5 // pred_region
      %s1159 = ssub.s32 %s17, 2
      // Predicated region
      $region73: #{vae_gmm_forward.1} parent=71 // pred_check
        %p1160 = pneg %p282
      $region74: #{vae_gmm_forward.1} parent=71 // pred_check_branch
        %1162 = sbr.rel (%p1160) target = $region76
      $region75: #{vae_gmm_forward.1} parent=71 // pred_region
        %s1163 = smul.u32 2, %s23
        %p1164 = scmp.lt.s32.totalorder %s1163, 7
        %s1165 = scalar_select %p1164, %s1163, 7
        %s1166 = smul.addr %s1165, 2
        %s1167 = smul.addr %s1166, 8
        %s1168 = scalar_lea.vmem %s11, %s1167
      $region76: #{vae_gmm_forward.1} parent=71 // pred_fallthru
        _
    $region72: #{vae_gmm_forward.1} parent=5 // pred_fallthru
      _
  $region6: #{vae_gmm_forward.1} parent=0 // loop_footer
    %s21 = sadd.s32 1, %s17
  $region7: #{vae_gmm_forward.1} parent=0 // loop_footer_branch
    %16 = sbr.rel target = $region3
  $region8: #{vae_gmm_forward.1} parent=0 // loop_exit
    _

</llo_original>
